<compile_context>
chip_gen: v7x
topology: tpu7x:2x2x1
jax: 0.10.0
libtpu: 0.0.40
codegen_flags: <defaults>
</compile_context>

<pallas_src>
import functools
import math

import jax
import jax.numpy as jnp
from jax.experimental import pallas as pl
from jax.experimental.pallas import tpu as pltpu


def _encoder_layer_kernel(x_ref, wqkv_ref, bqkv_ref, wo_ref, bo_ref,
                          gamma_ref, beta_ref,
                          out_ref, topv_ref, topi_ref, *, k_top):
    """Bt batch elements per grid step: fused attention + residual + LayerNorm + top-k."""
    Bt, L, E = x_ref.shape
    x = x_ref[...].astype(jnp.float32)                  # (Bt, L, E), kept for residual
    x2 = x.reshape(Bt * L, E)                           # pack rows for the MXU M-dim
    x_bf16 = x2.astype(jnp.bfloat16)

    # --- fused Q/K/V projection: one MXU pass, bf16 operands, f32 accumulation.
    #     Wq / bq already carry the 1/sqrt(E) attention scale (folded in wrapper).
    qkv = jnp.dot(x_bf16, wqkv_ref[...],
                  preferred_element_type=jnp.float32) + bqkv_ref[...]   # (Bt*L, 3E)
    q = qkv[:, :E].reshape(Bt, L, E)
    k = qkv[:, E:2 * E].reshape(Bt, L, E)
    v = qkv[:, 2 * E:].reshape(Bt, L, E)

    # --- scaled dot-product attention (single head), per batch element ---
    s = jnp.einsum('bqd,bkd->bqk',
                   q.astype(jnp.bfloat16), k.astype(jnp.bfloat16),
                   preferred_element_type=jnp.float32)                  # (Bt, L, L)
    m = jnp.max(s, axis=-1, keepdims=True)
    p = jnp.exp(s - m)
    denom = jnp.sum(p, axis=-1, keepdims=True)
    a = p * pl.reciprocal(denom, approx=True)                           # softmax (Bt, L, L)

    y = jnp.einsum('bqk,bkd->bqd',
                   a.astype(jnp.bfloat16), v.astype(jnp.bfloat16),
                   preferred_element_type=jnp.float32)                  # (Bt, L, E)
    y2 = jnp.dot(y.reshape(Bt * L, E).astype(jnp.bfloat16), wo_ref[...],
                 preferred_element_type=jnp.float32) + bo_ref[...]      # (Bt*L, E)

    # --- residual + LayerNorm (dropout == identity in eval mode), f32 math ---
    r = x2 + y2
    mu = jnp.mean(r, axis=-1, keepdims=True)
    var = jnp.mean((r - mu) * (r - mu), axis=-1, keepdims=True)
    norm = (r - mu) * jax.lax.rsqrt(var + 1e-5)
    out = norm * gamma_ref[...] + beta_ref[...]
    out_ref[...] = out.reshape(Bt, L, E).astype(out_ref.dtype)

    # --- in-kernel top-k over attention rows (k is small and static) ---
    # Iterative max + first-match-index + mask-with-(-inf); ties resolve to the
    # lowest index, matching jax.lax.top_k ordering.
    iota = jax.lax.broadcasted_iota(jnp.int32, a.shape, 2)              # (Bt, L, L)
    work = a
    vals, idxs = [], []
    for _ in range(k_top):
        mval = jnp.max(work, axis=-1, keepdims=True)                    # (Bt, L, 1)
        idx = jnp.min(jnp.where(work == mval, iota, L),
                      axis=-1, keepdims=True)                           # (Bt, L, 1)
        vals.append(mval)
        idxs.append(idx)
        work = jnp.where(iota == idx, -jnp.inf, work)
    topv_ref[...] = jnp.concatenate(vals, axis=-1).astype(topv_ref.dtype)
    topi_ref[...] = jnp.concatenate(idxs, axis=-1).astype(topi_ref.dtype)


def _pick_batch_tile(N, L, E, target_rows=512, vmem_budget_bytes=8 * 1024 * 1024):
    """Largest divisor Bt of N such that:
       * Bt*L <= target_rows (big MXU M-dim, bounded per-step latency),
       * the resident f32 working set (attention tile + qkv/out activations)
         stays well under VMEM,
       * >=2 grid steps remain when N allows (both v7x TensorCores get work)."""
    def vmem_ok(bt):
        rows = bt * L
        # attention tile + iota/work copies (3x L*L) + qkv/y/out activations (~6x E)
        bytes_f32 = rows * (3 * L + 6 * E) * 4
        return bytes_f32 <= vmem_budget_bytes

    divs = [d for d in range(1, N + 1) if N % d == 0]
    if N >= 2:
        two_step = [d for d in divs if N // d >= 2]
        if two_step:
            divs = two_step
    fitting = [d for d in divs if d * L <= target_rows and vmem_ok(d)]
    return max(fitting) if fitting else min(divs)


def transformer_encoder_layer(x, params, k_top):
    """Returns (x_out, edge_index, A_topk) mirroring the PyTorch forward."""
    N, L, E = x.shape
    assert 1 <= k_top <= L, "k_top must satisfy 1 <= k_top <= L"
    Bt = _pick_batch_tile(N, L, E)
    grid = (N // Bt,)

    # Pack Q/K/V weights into one (E, 3E) matrix; fold the 1/sqrt(E) attention
    # scale into Wq / bq (free: removes an (L, L)-sized multiply per row in the
    # kernel). Matmul weights stored as bf16 (halves weight bytes per grid
    # step); biases / LN params stay f32.
    scale = 1.0 / math.sqrt(E)
    wqkv = jnp.concatenate([params["wq"] * scale, params["wk"], params["wv"]],
                           axis=1).astype(jnp.bfloat16)                 # (E, 3E)
    bqkv = jnp.concatenate([params["bq"] * scale, params["bk"], params["bv"]],
                           axis=1).astype(jnp.float32)                  # (1, 3E)
    wo = params["wo"].astype(jnp.bfloat16)
    bo = params["bo"].astype(jnp.float32)
    gamma = params["gamma"].astype(jnp.float32)
    beta = params["beta"].astype(jnp.float32)

    def rep(shape):
        # full-array block, same block for every grid step
        ndim = len(shape)
        return pl.BlockSpec(shape, lambda i, _n=ndim: (0,) * _n)

    in_specs = [
        pl.BlockSpec((Bt, L, E), lambda i: (i, 0, 0)),  # x
        rep(wqkv.shape), rep(bqkv.shape),               # fused Wqkv, bqkv
        rep(wo.shape), rep(bo.shape),                   # Wo, bo
        rep(gamma.shape), rep(beta.shape),              # LayerNorm gamma, beta
    ]
    out_specs = [
        pl.BlockSpec((Bt, L, E), lambda i: (i, 0, 0)),      # encoder output
        pl.BlockSpec((Bt, L, k_top), lambda i: (i, 0, 0)),  # top-k attention values
        pl.BlockSpec((Bt, L, k_top), lambda i: (i, 0, 0)),  # top-k indices
    ]
    out_shapes = (
        jax.ShapeDtypeStruct((N, L, E), x.dtype),
        jax.ShapeDtypeStruct((N, L, k_top), jnp.float32),
        jax.ShapeDtypeStruct((N, L, k_top), jnp.int32),
    )

    out, A_topk, edge_index = pl.pallas_call(
        functools.partial(_encoder_layer_kernel, k_top=k_top),
        out_shape=out_shapes,
        grid_spec=pltpu.PrefetchScalarGridSpec(
            num_scalar_prefetch=0,
            grid=grid,
            in_specs=in_specs,
            out_specs=out_specs,
        ),
        compiler_params=pltpu.CompilerParams(
            dimension_semantics=("parallel",),
            vmem_limit_bytes=32 * 1024 * 1024,
        ),
    )(x, wqkv, bqkv, wo, bo, gamma, beta)

    # TODO(synk): for L >~ 1-2k the O(L^2) in-VMEM attention tile should be
    # KV-tiled (flash-style, extra 'arbitrary' grid axis), mandatory on v7x's
    # 64 MiB VMEM; not needed at these sizes.
    return out, edge_index, A_topk


def init_params(key, d_model):
    """Deterministic parameter init (matches shapes implied by the module)."""
    ks = jax.random.split(key, 4)
    scale = 1.0 / math.sqrt(d_model)

    def lin(k):
        return (scale * jax.random.normal(k, (d_model, d_model), jnp.float32),
                jnp.zeros((1, d_model), jnp.float32))

    wq, bq = lin(ks[0])
    wk, bk = lin(ks[1])
    wv, bv = lin(ks[2])
    wo, bo = lin(ks[3])
    return dict(
        wq=wq, bq=bq, wk=wk, bk=bk, wv=wv, bv=bv, wo=wo, bo=bo,
        gamma=jnp.ones((1, d_model), jnp.float32),   # LayerNorm default init
        beta=jnp.zeros((1, d_model), jnp.float32),
    )
    # TODO(synk): train-mode Dropout(p=0.1) omitted (eval-mode identity implemented).


if __name__ == "__main__":
    key = jax.random.PRNGKey(0)
    k_x, k_p = jax.random.split(key)

    N, L, E = 2, 8, 32       # batch, sequence length, d_model
    k_top = 4

    x = jax.random.normal(k_x, (N, L, E), jnp.float32)
    params = init_params(k_p, E)

    out, edge_index, A_topk = transformer_encoder_layer(x, params, k_top)
    jax.block_until_ready((out, edge_index, A_topk))

    assert out.shape == (N, L, E)
    assert edge_index.shape == (N, L, k_top)
    assert A_topk.shape == (N, L, k_top)
    assert edge_index.dtype == jnp.int32
    assert bool(jnp.all(jnp.isfinite(out)))
    assert bool(jnp.all((edge_index >= 0) & (edge_index < L)))
    print("KERNEL_OK")
</pallas_src>

<mosaic_0001>
module attributes {stable_mosaic.version = 11 : i64} {
  func.func @_encoder_layer_kernel(%arg0: i32, %arg1: memref<1x8x32xf32, #tpu.memory_space<vmem>>, %arg2: memref<32x96xbf16, #tpu.memory_space<vmem>>, %arg3: memref<1x96xf32, #tpu.memory_space<vmem>>, %arg4: memref<32x32xbf16, #tpu.memory_space<vmem>>, %arg5: memref<1x32xf32, #tpu.memory_space<vmem>>, %arg6: memref<1x32xf32, #tpu.memory_space<vmem>>, %arg7: memref<1x32xf32, #tpu.memory_space<vmem>>, %arg8: memref<1x8x32xf32, #tpu.memory_space<vmem>>, %arg9: memref<1x8x4xf32, #tpu.memory_space<vmem>>, %arg10: memref<1x8x4xi32, #tpu.memory_space<vmem>>) attributes {dimension_semantics = [#tpu.dimension_semantics<parallel>], iteration_bounds = array<i64: 2>, scalar_prefetch = 0 : i64, scratch_operands = 0 : i64, tpu.core_type = #tpu.core_type<tc>, window_params = [{transform_indices = @transform_0, window_bounds = array<i64: 1, 8, 32>}, {pipeline_mode = #tpu.pipeline_mode<synchronous>, transform_indices = @transform_1, window_bounds = array<i64: 32, 96>}, {pipeline_mode = #tpu.pipeline_mode<synchronous>, transform_indices = @transform_2, window_bounds = array<i64: 1, 96>}, {pipeline_mode = #tpu.pipeline_mode<synchronous>, transform_indices = @transform_3, window_bounds = array<i64: 32, 32>}, {pipeline_mode = #tpu.pipeline_mode<synchronous>, transform_indices = @transform_4, window_bounds = array<i64: 1, 32>}, {pipeline_mode = #tpu.pipeline_mode<synchronous>, transform_indices = @transform_5, window_bounds = array<i64: 1, 32>}, {pipeline_mode = #tpu.pipeline_mode<synchronous>, transform_indices = @transform_6, window_bounds = array<i64: 1, 32>}, {transform_indices = @transform_7, window_bounds = array<i64: 1, 8, 32>}, {transform_indices = @transform_8, window_bounds = array<i64: 1, 8, 4>}, {transform_indices = @transform_9, window_bounds = array<i64: 1, 8, 4>}]} {
    %c0 = arith.constant 0 : index
    %c0_0 = arith.constant 0 : index
    %c0_1 = arith.constant 0 : index
    %0 = vector.load %arg1[%c0, %c0_0, %c0_1] : memref<1x8x32xf32, #tpu.memory_space<vmem>>, vector<1x8x32xf32>
    %1 = vector.shape_cast %0 : vector<1x8x32xf32> to vector<8x32xf32>
    %2 = arith.truncf %1 : vector<8x32xf32> to vector<8x32xbf16>
    %c0_2 = arith.constant 0 : index
    %c0_3 = arith.constant 0 : index
    %3 = vector.load %arg2[%c0_2, %c0_3] : memref<32x96xbf16, #tpu.memory_space<vmem>>, vector<32x96xbf16>
    %cst = arith.constant dense<0.000000e+00> : vector<8x96xf32>
    %4 = tpu.matmul %2, %3, %cst {dimension_numbers = #tpu.dot_dimension_numbers<[1], [0], [0], [1], [0, 0, 1, 1], [], []>} : vector<8x32xbf16>, vector<32x96xbf16>, vector<8x96xf32> -> vector<8x96xf32>
    %c0_4 = arith.constant 0 : index
    %c0_5 = arith.constant 0 : index
    %5 = vector.load %arg3[%c0_4, %c0_5] : memref<1x96xf32, #tpu.memory_space<vmem>>, vector<1x96xf32>
    %6 = vector.broadcast %5 : vector<1x96xf32> to vector<8x96xf32>
    %7 = arith.addf %4, %6 : vector<8x96xf32>
    %8 = vector.extract_strided_slice %7 {offsets = [0, 0], sizes = [8, 32], strides = [1, 1]} : vector<8x96xf32> to vector<8x32xf32>
    %9 = vector.shape_cast %8 : vector<8x32xf32> to vector<1x8x32xf32>
    %10 = vector.extract_strided_slice %7 {offsets = [0, 32], sizes = [8, 32], strides = [1, 1]} : vector<8x96xf32> to vector<8x32xf32>
    %11 = vector.shape_cast %10 : vector<8x32xf32> to vector<1x8x32xf32>
    %12 = vector.extract_strided_slice %7 {offsets = [0, 64], sizes = [8, 32], strides = [1, 1]} : vector<8x96xf32> to vector<8x32xf32>
    %13 = vector.shape_cast %12 : vector<8x32xf32> to vector<1x8x32xf32>
    %14 = arith.truncf %9 : vector<1x8x32xf32> to vector<1x8x32xbf16>
    %15 = arith.truncf %11 : vector<1x8x32xf32> to vector<1x8x32xbf16>
    "tpu.trace_start"() <{level = 10 : i32, message = "bqd,bkd->bqk"}> : () -> ()
    %cst_6 = arith.constant dense<0.000000e+00> : vector<1x8x8xf32>
    %16 = tpu.matmul %14, %15, %cst_6 {dimension_numbers = #tpu.dot_dimension_numbers<[2], [2], [1], [1], [0, 0, 0, 1, 1, 1], [0], [0]>} : vector<1x8x32xbf16>, vector<1x8x32xbf16>, vector<1x8x8xf32> -> vector<1x8x8xf32>
    "tpu.trace_stop"() : () -> ()
    %cst_7 = arith.constant dense<0xFF800000> : vector<1x8xf32>
    %17 = vector.multi_reduction <maximumf>, %16, %cst_7 [2] : vector<1x8x8xf32> to vector<1x8xf32>
    %18 = vector.shape_cast %17 : vector<1x8xf32> to vector<1x8x1xf32>
    %19 = vector.broadcast %18 : vector<1x8x1xf32> to vector<1x8x8xf32>
    %20 = arith.subf %16, %19 : vector<1x8x8xf32>
    %21 = math.exp %20 : vector<1x8x8xf32>
    %cst_8 = arith.constant dense<0.000000e+00> : vector<1x8xf32>
    %22 = vector.multi_reduction <add>, %21, %cst_8 [2] : vector<1x8x8xf32> to vector<1x8xf32>
    %23 = vector.shape_cast %22 : vector<1x8xf32> to vector<1x8x1xf32>
    %24 = tpu.reciprocal %23 {approx = true} : vector<1x8x1xf32> -> vector<1x8x1xf32>
    %25 = vector.broadcast %24 : vector<1x8x1xf32> to vector<1x8x8xf32>
    %26 = arith.mulf %21, %25 : vector<1x8x8xf32>
    %27 = arith.truncf %26 : vector<1x8x8xf32> to vector<1x8x8xbf16>
    %28 = arith.truncf %13 : vector<1x8x32xf32> to vector<1x8x32xbf16>
    "tpu.trace_start"() <{level = 10 : i32, message = "bqk,bkd->bqd"}> : () -> ()
    %cst_9 = arith.constant dense<0.000000e+00> : vector<1x8x32xf32>
    %29 = tpu.matmul %27, %28, %cst_9 {dimension_numbers = #tpu.dot_dimension_numbers<[2], [1], [1], [2], [0, 0, 0, 1, 1, 2], [0], [0]>} : vector<1x8x8xbf16>, vector<1x8x32xbf16>, vector<1x8x32xf32> -> vector<1x8x32xf32>
    "tpu.trace_stop"() : () -> ()
    %30 = vector.shape_cast %29 : vector<1x8x32xf32> to vector<8x32xf32>
    %31 = arith.truncf %30 : vector<8x32xf32> to vector<8x32xbf16>
    %c0_10 = arith.constant 0 : index
    %c0_11 = arith.constant 0 : index
    %32 = vector.load %arg4[%c0_10, %c0_11] : memref<32x32xbf16, #tpu.memory_space<vmem>>, vector<32x32xbf16>
    %cst_12 = arith.constant dense<0.000000e+00> : vector<8x32xf32>
    %33 = tpu.matmul %31, %32, %cst_12 {dimension_numbers = #tpu.dot_dimension_numbers<[1], [0], [0], [1], [0, 0, 1, 1], [], []>} : vector<8x32xbf16>, vector<32x32xbf16>, vector<8x32xf32> -> vector<8x32xf32>
    %c0_13 = arith.constant 0 : index
    %c0_14 = arith.constant 0 : index
    %34 = vector.load %arg5[%c0_13, %c0_14] : memref<1x32xf32, #tpu.memory_space<vmem>>, vector<1x32xf32>
    %35 = vector.broadcast %34 : vector<1x32xf32> to vector<8x32xf32>
    %36 = arith.addf %33, %35 : vector<8x32xf32>
    %37 = arith.addf %1, %36 : vector<8x32xf32>
    %cst_15 = arith.constant dense<0.000000e+00> : vector<8xf32>
    %38 = vector.multi_reduction <add>, %37, %cst_15 [1] : vector<8x32xf32> to vector<8xf32>
    %39 = vector.shape_cast %38 : vector<8xf32> to vector<8x1xf32>
    %cst_16 = arith.constant 3.200000e+01 : f32
    %40 = vector.broadcast %cst_16 : f32 to vector<8x1xf32>
    %41 = arith.divf %39, %40 : vector<8x1xf32>
    %42 = vector.broadcast %41 : vector<8x1xf32> to vector<8x32xf32>
    %43 = arith.subf %37, %42 : vector<8x32xf32>
    %44 = vector.broadcast %41 : vector<8x1xf32> to vector<8x32xf32>
    %45 = arith.subf %37, %44 : vector<8x32xf32>
    %46 = arith.mulf %43, %45 : vector<8x32xf32>
    %cst_17 = arith.constant dense<0.000000e+00> : vector<8xf32>
    %47 = vector.multi_reduction <add>, %46, %cst_17 [1] : vector<8x32xf32> to vector<8xf32>
    %48 = vector.shape_cast %47 : vector<8xf32> to vector<8x1xf32>
    %cst_18 = arith.constant 3.200000e+01 : f32
    %49 = vector.broadcast %cst_18 : f32 to vector<8x1xf32>
    %50 = arith.divf %48, %49 : vector<8x1xf32>
    %51 = vector.broadcast %41 : vector<8x1xf32> to vector<8x32xf32>
    %52 = arith.subf %37, %51 : vector<8x32xf32>
    %cst_19 = arith.constant 9.99999974E-6 : f32
    %53 = vector.broadcast %cst_19 : f32 to vector<8x1xf32>
    %54 = arith.addf %50, %53 : vector<8x1xf32>
    %55 = math.rsqrt %54 : vector<8x1xf32>
    %56 = vector.broadcast %55 : vector<8x1xf32> to vector<8x32xf32>
    %57 = arith.mulf %52, %56 : vector<8x32xf32>
    %c0_20 = arith.constant 0 : index
    %c0_21 = arith.constant 0 : index
    %58 = vector.load %arg6[%c0_20, %c0_21] : memref<1x32xf32, #tpu.memory_space<vmem>>, vector<1x32xf32>
    %59 = vector.broadcast %58 : vector<1x32xf32> to vector<8x32xf32>
    %60 = arith.mulf %57, %59 : vector<8x32xf32>
    %c0_22 = arith.constant 0 : index
    %c0_23 = arith.constant 0 : index
    %61 = vector.load %arg7[%c0_22, %c0_23] : memref<1x32xf32, #tpu.memory_space<vmem>>, vector<1x32xf32>
    %62 = vector.broadcast %61 : vector<1x32xf32> to vector<8x32xf32>
    %63 = arith.addf %60, %62 : vector<8x32xf32>
    %64 = vector.shape_cast %63 : vector<8x32xf32> to vector<1x8x32xf32>
    %c0_24 = arith.constant 0 : index
    %c0_25 = arith.constant 0 : index
    %c0_26 = arith.constant 0 : index
    %65 = vector.load %arg8[%c0_24, %c0_25, %c0_26] : memref<1x8x32xf32, #tpu.memory_space<vmem>>, vector<1x8x32xf32>
    tpu.vector_store %arg8[%c0_24, %c0_25, %c0_26], %64 {strides = array<i32>} : memref<1x8x32xf32, #tpu.memory_space<vmem>>, vector<1x8x32xf32>,
    %66 = tpu.iota {dimensions = array<i32: 2>} : vector<1x8x8xi32>
    %cst_27 = arith.constant dense<0xFF800000> : vector<1x8xf32>
    %67 = vector.multi_reduction <maximumf>, %26, %cst_27 [2] : vector<1x8x8xf32> to vector<1x8xf32>
    %68 = vector.shape_cast %67 : vector<1x8xf32> to vector<1x8x1xf32>
    %69 = vector.broadcast %68 : vector<1x8x1xf32> to vector<1x8x8xf32>
    %70 = arith.cmpf oeq, %26, %69 : vector<1x8x8xf32>
    %c8_i32 = arith.constant 8 : i32
    %71 = vector.broadcast %c8_i32 : i32 to vector<1x8x8xi32>
    %72 = arith.select %70, %66, %71 : vector<1x8x8xi1>, vector<1x8x8xi32>
    %cst_28 = arith.constant dense<2147483647> : vector<1x8xi32>
    %73 = vector.multi_reduction <minsi>, %72, %cst_28 [2] : vector<1x8x8xi32> to vector<1x8xi32>
    %74 = vector.shape_cast %73 : vector<1x8xi32> to vector<1x8x1xi32>
    %75 = vector.broadcast %74 : vector<1x8x1xi32> to vector<1x8x8xi32>
    %76 = arith.cmpi eq, %66, %75 : vector<1x8x8xi32>
    %cst_29 = arith.constant 0xFF800000 : f32
    %77 = vector.broadcast %cst_29 : f32 to vector<1x8x8xf32>
    %78 = arith.select %76, %77, %26 : vector<1x8x8xi1>, vector<1x8x8xf32>
    %cst_30 = arith.constant dense<0xFF800000> : vector<1x8xf32>
    %79 = vector.multi_reduction <maximumf>, %78, %cst_30 [2] : vector<1x8x8xf32> to vector<1x8xf32>
    %80 = vector.shape_cast %79 : vector<1x8xf32> to vector<1x8x1xf32>
    %81 = vector.broadcast %80 : vector<1x8x1xf32> to vector<1x8x8xf32>
    %82 = arith.cmpf oeq, %78, %81 : vector<1x8x8xf32>
    %c8_i32_31 = arith.constant 8 : i32
    %83 = vector.broadcast %c8_i32_31 : i32 to vector<1x8x8xi32>
    %84 = arith.select %82, %66, %83 : vector<1x8x8xi1>, vector<1x8x8xi32>
    %cst_32 = arith.constant dense<2147483647> : vector<1x8xi32>
    %85 = vector.multi_reduction <minsi>, %84, %cst_32 [2] : vector<1x8x8xi32> to vector<1x8xi32>
    %86 = vector.shape_cast %85 : vector<1x8xi32> to vector<1x8x1xi32>
    %87 = vector.broadcast %86 : vector<1x8x1xi32> to vector<1x8x8xi32>
    %88 = arith.cmpi eq, %66, %87 : vector<1x8x8xi32>
    %cst_33 = arith.constant 0xFF800000 : f32
    %89 = vector.broadcast %cst_33 : f32 to vector<1x8x8xf32>
    %90 = arith.select %88, %89, %78 : vector<1x8x8xi1>, vector<1x8x8xf32>
    %cst_34 = arith.constant dense<0xFF800000> : vector<1x8xf32>
    %91 = vector.multi_reduction <maximumf>, %90, %cst_34 [2] : vector<1x8x8xf32> to vector<1x8xf32>
    %92 = vector.shape_cast %91 : vector<1x8xf32> to vector<1x8x1xf32>
    %93 = vector.broadcast %92 : vector<1x8x1xf32> to vector<1x8x8xf32>
    %94 = arith.cmpf oeq, %90, %93 : vector<1x8x8xf32>
    %c8_i32_35 = arith.constant 8 : i32
    %95 = vector.broadcast %c8_i32_35 : i32 to vector<1x8x8xi32>
    %96 = arith.select %94, %66, %95 : vector<1x8x8xi1>, vector<1x8x8xi32>
    %cst_36 = arith.constant dense<2147483647> : vector<1x8xi32>
    %97 = vector.multi_reduction <minsi>, %96, %cst_36 [2] : vector<1x8x8xi32> to vector<1x8xi32>
    %98 = vector.shape_cast %97 : vector<1x8xi32> to vector<1x8x1xi32>
    %99 = vector.broadcast %98 : vector<1x8x1xi32> to vector<1x8x8xi32>
    %100 = arith.cmpi eq, %66, %99 : vector<1x8x8xi32>
    %cst_37 = arith.constant 0xFF800000 : f32
    %101 = vector.broadcast %cst_37 : f32 to vector<1x8x8xf32>
    %102 = arith.select %100, %101, %90 : vector<1x8x8xi1>, vector<1x8x8xf32>
    %cst_38 = arith.constant dense<0xFF800000> : vector<1x8xf32>
    %103 = vector.multi_reduction <maximumf>, %102, %cst_38 [2] : vector<1x8x8xf32> to vector<1x8xf32>
    %104 = vector.shape_cast %103 : vector<1x8xf32> to vector<1x8x1xf32>
    %105 = vector.broadcast %104 : vector<1x8x1xf32> to vector<1x8x8xf32>
    %106 = arith.cmpf oeq, %102, %105 : vector<1x8x8xf32>
    %c8_i32_39 = arith.constant 8 : i32
    %107 = vector.broadcast %c8_i32_39 : i32 to vector<1x8x8xi32>
    %108 = arith.select %106, %66, %107 : vector<1x8x8xi1>, vector<1x8x8xi32>
    %cst_40 = arith.constant dense<2147483647> : vector<1x8xi32>
    %109 = vector.multi_reduction <minsi>, %108, %cst_40 [2] : vector<1x8x8xi32> to vector<1x8xi32>
    %110 = vector.shape_cast %109 : vector<1x8xi32> to vector<1x8x1xi32>
    %111 = tpu.concatenate %68, %80, %92, %104 in 2 : vector<1x8x1xf32>, vector<1x8x1xf32>, vector<1x8x1xf32>, vector<1x8x1xf32> -> vector<1x8x4xf32>
    %c0_41 = arith.constant 0 : index
    %c0_42 = arith.constant 0 : index
    %c0_43 = arith.constant 0 : index
    %112 = vector.load %arg9[%c0_41, %c0_42, %c0_43] : memref<1x8x4xf32, #tpu.memory_space<vmem>>, vector<1x8x4xf32>
    tpu.vector_store %arg9[%c0_41, %c0_42, %c0_43], %111 {strides = array<i32>} : memref<1x8x4xf32, #tpu.memory_space<vmem>>, vector<1x8x4xf32>,
    %113 = tpu.concatenate %74, %86, %98, %110 in 2 : vector<1x8x1xi32>, vector<1x8x1xi32>, vector<1x8x1xi32>, vector<1x8x1xi32> -> vector<1x8x4xi32>
    %c0_44 = arith.constant 0 : index
    %c0_45 = arith.constant 0 : index
    %c0_46 = arith.constant 0 : index
    %114 = vector.load %arg10[%c0_44, %c0_45, %c0_46] : memref<1x8x4xi32, #tpu.memory_space<vmem>>, vector<1x8x4xi32>
    tpu.vector_store %arg10[%c0_44, %c0_45, %c0_46], %113 {strides = array<i32>} : memref<1x8x4xi32, #tpu.memory_space<vmem>>, vector<1x8x4xi32>,
    return
  }
  func.func @transform_0(%arg0: i32) -> (i32, i32, i32) {
    %c0_i32 = arith.constant 0 : i32
    %c0_i32_0 = arith.constant 0 : i32
    %c0_i32_1 = arith.constant 0 : i32
    return %arg0, %c0_i32, %c0_i32_0 : i32, i32, i32
  }
  func.func @transform_1(%arg0: i32) -> (i32, i32) {
    %c0_i32 = arith.constant 0 : i32
    %c0_i32_0 = arith.constant 0 : i32
    %c0_i32_1 = arith.constant 0 : i32
    return %c0_i32, %c0_i32_0 : i32, i32
  }
  func.func @transform_2(%arg0: i32) -> (i32, i32) {
    %c0_i32 = arith.constant 0 : i32
    %c0_i32_0 = arith.constant 0 : i32
    %c0_i32_1 = arith.constant 0 : i32
    return %c0_i32, %c0_i32_0 : i32, i32
  }
  func.func @transform_3(%arg0: i32) -> (i32, i32) {
    %c0_i32 = arith.constant 0 : i32
    %c0_i32_0 = arith.constant 0 : i32
    %c0_i32_1 = arith.constant 0 : i32
    return %c0_i32, %c0_i32_0 : i32, i32
  }
  func.func @transform_4(%arg0: i32) -> (i32, i32) {
    %c0_i32 = arith.constant 0 : i32
    %c0_i32_0 = arith.constant 0 : i32
    %c0_i32_1 = arith.constant 0 : i32
    return %c0_i32, %c0_i32_0 : i32, i32
  }
  func.func @transform_5(%arg0: i32) -> (i32, i32) {
    %c0_i32 = arith.constant 0 : i32
    %c0_i32_0 = arith.constant 0 : i32
    %c0_i32_1 = arith.constant 0 : i32
    return %c0_i32, %c0_i32_0 : i32, i32
  }
  func.func @transform_6(%arg0: i32) -> (i32, i32) {
    %c0_i32 = arith.constant 0 : i32
    %c0_i32_0 = arith.constant 0 : i32
    %c0_i32_1 = arith.constant 0 : i32
    return %c0_i32, %c0_i32_0 : i32, i32
  }
  func.func @transform_7(%arg0: i32) -> (i32, i32, i32) {
    %c0_i32 = arith.constant 0 : i32
    %c0_i32_0 = arith.constant 0 : i32
    %c0_i32_1 = arith.constant 0 : i32
    return %arg0, %c0_i32, %c0_i32_0 : i32, i32, i32
  }
  func.func @transform_8(%arg0: i32) -> (i32, i32, i32) {
    %c0_i32 = arith.constant 0 : i32
    %c0_i32_0 = arith.constant 0 : i32
    %c0_i32_1 = arith.constant 0 : i32
    return %arg0, %c0_i32, %c0_i32_0 : i32, i32, i32
  }
  func.func @transform_9(%arg0: i32) -> (i32, i32, i32) {
    %c0_i32 = arith.constant 0 : i32
    %c0_i32_0 = arith.constant 0 : i32
    %c0_i32_1 = arith.constant 0 : i32
    return %arg0, %c0_i32, %c0_i32_0 : i32, i32, i32
  }
}

</mosaic_0001>

<llo_original>
// kernel: tpu_custom_call.1
$region0: #{tpu_custom_call.1}
  #allocation0 [shape = 'u32[]', space=smem, size = 0x4, offset = 0x4, fixed_abs, tag = 'smem constant byte address 0x4 - core index']
  #allocation1 [shape = 'u32[144,128]{1,0:T(1,128)}', space=vmem, size = 0x12000, scoped, tag = 'internal scratch']
  %s0 = inlined_call_operand.hbm [shape: f32[2,8,32], index: 0, kind: input, shape index: {}]
  %s1 = inlined_call_operand.hbm [shape: bf16[32,96], index: 1, kind: input, shape index: {}]
  %s2 = inlined_call_operand.vmem [shape: f32[1,96], index: 2, kind: input, shape index: {}]
  %s3 = inlined_call_operand.hbm [shape: bf16[32,32], index: 3, kind: input, shape index: {}]
  %s4 = inlined_call_operand.vmem [shape: f32[1,32], index: 4, kind: input, shape index: {}]
  %s5 = inlined_call_operand.vmem [shape: f32[1,32], index: 5, kind: input, shape index: {}]
  %s6 = inlined_call_operand.vmem [shape: f32[1,32], index: 6, kind: input, shape index: {}]
  %s7 = inlined_call_operand.hbm [shape: f32[2,8,32], index: 7, kind: output, shape index: {0}]
  %s8 = inlined_call_operand.vmem [shape: f32[2,8,4], index: 8, kind: output, shape index: {1}]
  %s9 = inlined_call_operand.vmem [shape: s32[2,8,4], index: 9, kind: output, shape index: {2}]
  %10 = xla_tuple %s7, %s8, %s9
  %s11 = sld [smem:[#allocation0]]
  $region89: #{tpu_custom_call.1} parent=0
    _
  %s13 = ssub.s32 1, %s11
  %s14 = scalar_select 0, %s13, %s11
  $region1: #{tpu_custom_call.1} parent=0
    #allocation2 [shape = 'u8[8192]{0}', space=vmem, size = 0x2000, scoped, tag = 'input window, operand 0']
    #allocation3 [shape = 's32[2]{0}', space=sflag, size = 0x8, scoped, tag = 'scoped memory for tpu_custom_call.1']
    #allocation4 [shape = 's32[2]{0}', space=sflag, size = 0x8, scoped, tag = 'scoped memory for tpu_custom_call.1']
    #allocation5 [shape = 'u8[8192]{0}', space=vmem, size = 0x2000, scoped, tag = 'input window, operand 1, single buffered']
    #allocation6 [shape = 's32[1]{0}', space=sflag, size = 0x4, scoped, tag = 'scoped memory for tpu_custom_call.1']
    #allocation7 [shape = 'u8[8192]{0}', space=vmem, size = 0x2000, scoped, tag = 'input window, operand 3, single buffered']
    #allocation8 [shape = 'u8[8192]{0}', space=vmem, size = 0x2000, scoped, tag = 'output window, operand 0']
    %15 = vsyncpa [#allocation3], 0
    %s16 = scalar_lea.sflag [#allocation3], 1
    %17 = vsyncpa %s16, 0
    %18 = vsyncpa [#allocation6], 0
    %19 = vsyncpa [#allocation4], 0
    %s20 = scalar_lea.sflag [#allocation4], 1
    %21 = vsyncpa %s20, 0
    loop: start=0, step=1, limit=4
    $region2: #{tpu_custom_call.1} parent=1 // loop_pre_header
      _
    $region3: #{tpu_custom_call.1} parent=1 // loop_header
      %s23 = sphi 0, %s27
      %p24 = scmp.ge.s32.totalorder %s23, 4
      %s33 = sphi 0, %s35
      %s36 = sphi 0, %s33
      %s37 = sphi 0, %s36
      %s53 = sphi 0, %s37
      %s57 = sphi 0, %s57
      %s59 = sphi 0, %s57
      %s60 = sphi 0, %s59
      %s74 = sphi 0, %s60
      %s78 = sphi 0, %s78
      %s80 = sphi 0, %s78
      %s81 = sphi 0, %s80
      %s95 = sphi 0, %s81
      %s99 = sphi 0, %s99
      %s101 = sphi 0, %s99
      %s102 = sphi 0, %s101
      %s116 = sphi 0, %s102
      %s120 = sphi 0, %s120
      %s122 = sphi 0, %s120
      %s123 = sphi 0, %s122
      %s137 = sphi 0, %s123
      %s141 = sphi 0, %s141
      %s143 = sphi 0, %s141
      %s144 = sphi 0, %s143
      %s158 = sphi 0, %s144
      %s162 = sphi 0, %s162
      %s164 = sphi 0, %s162
      %s165 = sphi 0, %s164
      %s179 = sphi 0, %s165
      %s185 = sphi 0, %s187
      %s188 = sphi 0, %s185
      %s189 = sphi 0, %s188
      %s205 = sphi 0, %s189
      %s211 = sphi 0, %s213
      %s214 = sphi 0, %s211
      %s215 = sphi 0, %s214
      %s231 = sphi 0, %s215
      %s237 = sphi 0, %s239
      %s240 = sphi 0, %s237
      %s241 = sphi 0, %s240
      %s257 = sphi 0, %s241
    $region4: #{tpu_custom_call.1} parent=1 // loop_header_branch
      %26 = sbr.rel (%p24) target = $region8
    $region5: #{tpu_custom_call.1} parent=1 // loop_body
      %s28 = ssub.s32 %s23, 1
      %s29 = ssub.s32 %s23, 2
      %s30 = sadd.s32 %s23, 1
      %s31 = ssub.s32 %s23, %s30
      %p32 = scmp.eq.s32.totalorder %s31, 0
      %s34 = sadd.s32 %s33, 1
      %s35 = scalar_select %p32, %s33, %s34
      %p38 = pneg %p32
      %p39 = scmp.eq.s32.totalorder %s23, 1
      %p40 = por %p38, %p39
      %p41 = scmp.ne.s32.totalorder %s33, %s36
      %p42 = scmp.eq.s32.totalorder %s23, 0
      %p43 = por %p41, %p42
      %p44 = scmp.ne.s32.totalorder %s33, %s36
      %p45 = scmp.eq.s32.totalorder %s28, 1
      %p46 = por %p44, %p45
      %p47 = scmp.ne.s32.totalorder %s36, %s37
      %p48 = scmp.eq.s32.totalorder %s28, 0
      %p49 = por %p47, %p48
      %p50 = scmp.ne.s32.totalorder %s36, %s37
      %p51 = scmp.eq.s32.totalorder %s29, 1
      %p52 = por %p50, %p51
      %p54 = scmp.ne.s32.totalorder %s37, %s53
      %p55 = scmp.eq.s32.totalorder %s29, 0
      %p56 = por %p54, %p55
      %s58 = sadd.s32 %s57, 1
      %p61 = scmp.eq.s32.totalorder %s23, 1
      %p62 = scmp.ne.s32.totalorder %s57, %s59
      %p63 = scmp.eq.s32.totalorder %s23, 0
      %p64 = por %p62, %p63
      %p65 = scmp.ne.s32.totalorder %s57, %s59
      %p66 = scmp.eq.s32.totalorder %s28, 1
      %p67 = por %p65, %p66
      %p68 = scmp.ne.s32.totalorder %s59, %s60
      %p69 = scmp.eq.s32.totalorder %s28, 0
      %p70 = por %p68, %p69
      %p71 = scmp.ne.s32.totalorder %s59, %s60
      %p72 = scmp.eq.s32.totalorder %s29, 1
      %p73 = por %p71, %p72
      %p75 = scmp.ne.s32.totalorder %s60, %s74
      %p76 = scmp.eq.s32.totalorder %s29, 0
      %p77 = por %p75, %p76
      %s79 = sadd.s32 %s78, 1
      %p82 = scmp.eq.s32.totalorder %s23, 1
      %p83 = scmp.ne.s32.totalorder %s78, %s80
      %p84 = scmp.eq.s32.totalorder %s23, 0
      %p85 = por %p83, %p84
      %p86 = scmp.ne.s32.totalorder %s78, %s80
      %p87 = scmp.eq.s32.totalorder %s28, 1
      %p88 = por %p86, %p87
      %p89 = scmp.ne.s32.totalorder %s80, %s81
      %p90 = scmp.eq.s32.totalorder %s28, 0
      %p91 = por %p89, %p90
      %p92 = scmp.ne.s32.totalorder %s80, %s81
      %p93 = scmp.eq.s32.totalorder %s29, 1
      %p94 = por %p92, %p93
      %p96 = scmp.ne.s32.totalorder %s81, %s95
      %p97 = scmp.eq.s32.totalorder %s29, 0
      %p98 = por %p96, %p97
      %s100 = sadd.s32 %s99, 1
      %p103 = scmp.eq.s32.totalorder %s23, 1
      %p104 = scmp.ne.s32.totalorder %s99, %s101
      %p105 = scmp.eq.s32.totalorder %s23, 0
      %p106 = por %p104, %p105
      %p107 = scmp.ne.s32.totalorder %s99, %s101
      %p108 = scmp.eq.s32.totalorder %s28, 1
      %p109 = por %p107, %p108
      %p110 = scmp.ne.s32.totalorder %s101, %s102
      %p111 = scmp.eq.s32.totalorder %s28, 0
      %p112 = por %p110, %p111
      %p113 = scmp.ne.s32.totalorder %s101, %s102
      %p114 = scmp.eq.s32.totalorder %s29, 1
      %p115 = por %p113, %p114
      %p117 = scmp.ne.s32.totalorder %s102, %s116
      %p118 = scmp.eq.s32.totalorder %s29, 0
      %p119 = por %p117, %p118
      %s121 = sadd.s32 %s120, 1
      %p124 = scmp.eq.s32.totalorder %s23, 1
      %p125 = scmp.ne.s32.totalorder %s120, %s122
      %p126 = scmp.eq.s32.totalorder %s23, 0
      %p127 = por %p125, %p126
      %p128 = scmp.ne.s32.totalorder %s120, %s122
      %p129 = scmp.eq.s32.totalorder %s28, 1
      %p130 = por %p128, %p129
      %p131 = scmp.ne.s32.totalorder %s122, %s123
      %p132 = scmp.eq.s32.totalorder %s28, 0
      %p133 = por %p131, %p132
      %p134 = scmp.ne.s32.totalorder %s122, %s123
      %p135 = scmp.eq.s32.totalorder %s29, 1
      %p136 = por %p134, %p135
      %p138 = scmp.ne.s32.totalorder %s123, %s137
      %p139 = scmp.eq.s32.totalorder %s29, 0
      %p140 = por %p138, %p139
      %s142 = sadd.s32 %s141, 1
      %p145 = scmp.eq.s32.totalorder %s23, 1
      %p146 = scmp.ne.s32.totalorder %s141, %s143
      %p147 = scmp.eq.s32.totalorder %s23, 0
      %p148 = por %p146, %p147
      %p149 = scmp.ne.s32.totalorder %s141, %s143
      %p150 = scmp.eq.s32.totalorder %s28, 1
      %p151 = por %p149, %p150
      %p152 = scmp.ne.s32.totalorder %s143, %s144
      %p153 = scmp.eq.s32.totalorder %s28, 0
      %p154 = por %p152, %p153
      %p155 = scmp.ne.s32.totalorder %s143, %s144
      %p156 = scmp.eq.s32.totalorder %s29, 1
      %p157 = por %p155, %p156
      %p159 = scmp.ne.s32.totalorder %s144, %s158
      %p160 = scmp.eq.s32.totalorder %s29, 0
      %p161 = por %p159, %p160
      %s163 = sadd.s32 %s162, 1
      %p166 = scmp.eq.s32.totalorder %s23, 1
      %p167 = scmp.ne.s32.totalorder %s162, %s164
      %p168 = scmp.eq.s32.totalorder %s23, 0
      %p169 = por %p167, %p168
      %p170 = scmp.ne.s32.totalorder %s162, %s164
      %p171 = scmp.eq.s32.totalorder %s28, 1
      %p172 = por %p170, %p171
      %p173 = scmp.ne.s32.totalorder %s164, %s165
      %p174 = scmp.eq.s32.totalorder %s28, 0
      %p175 = por %p173, %p174
      %p176 = scmp.ne.s32.totalorder %s164, %s165
      %p177 = scmp.eq.s32.totalorder %s29, 1
      %p178 = por %p176, %p177
      %p180 = scmp.ne.s32.totalorder %s165, %s179
      %p181 = scmp.eq.s32.totalorder %s29, 0
      %p182 = por %p180, %p181
      %s183 = ssub.s32 %s23, %s30
      %p184 = scmp.eq.s32.totalorder %s183, 0
      %s186 = sadd.s32 %s185, 1
      %s187 = scalar_select %p184, %s185, %s186
      %p190 = pneg %p184
      %p191 = scmp.eq.s32.totalorder %s23, 1
      %p192 = por %p190, %p191
      %p193 = scmp.ne.s32.totalorder %s185, %s188
      %p194 = scmp.eq.s32.totalorder %s23, 0
      %p195 = por %p193, %p194
      %p196 = scmp.ne.s32.totalorder %s185, %s188
      %p197 = scmp.eq.s32.totalorder %s28, 1
      %p198 = por %p196, %p197
      %p199 = scmp.ne.s32.totalorder %s188, %s189
      %p200 = scmp.eq.s32.totalorder %s28, 0
      %p201 = por %p199, %p200
      %p202 = scmp.ne.s32.totalorder %s188, %s189
      %p203 = scmp.eq.s32.totalorder %s29, 1
      %p204 = por %p202, %p203
      %p206 = scmp.ne.s32.totalorder %s189, %s205
      %p207 = scmp.eq.s32.totalorder %s29, 0
      %p208 = por %p206, %p207
      %s209 = ssub.s32 %s23, %s30
      %p210 = scmp.eq.s32.totalorder %s209, 0
      %s212 = sadd.s32 %s211, 1
      %s213 = scalar_select %p210, %s211, %s212
      %p216 = pneg %p210
      %p217 = scmp.eq.s32.totalorder %s23, 1
      %p218 = por %p216, %p217
      %p219 = scmp.ne.s32.totalorder %s211, %s214
      %p220 = scmp.eq.s32.totalorder %s23, 0
      %p221 = por %p219, %p220
      %p222 = scmp.ne.s32.totalorder %s211, %s214
      %p223 = scmp.eq.s32.totalorder %s28, 1
      %p224 = por %p222, %p223
      %p225 = scmp.ne.s32.totalorder %s214, %s215
      %p226 = scmp.eq.s32.totalorder %s28, 0
      %p227 = por %p225, %p226
      %p228 = scmp.ne.s32.totalorder %s214, %s215
      %p229 = scmp.eq.s32.totalorder %s29, 1
      %p230 = por %p228, %p229
      %p232 = scmp.ne.s32.totalorder %s215, %s231
      %p233 = scmp.eq.s32.totalorder %s29, 0
      %p234 = por %p232, %p233
      %s235 = ssub.s32 %s23, %s30
      %p236 = scmp.eq.s32.totalorder %s235, 0
      %s238 = sadd.s32 %s237, 1
      %s239 = scalar_select %p236, %s237, %s238
      %p242 = pneg %p236
      %p243 = scmp.eq.s32.totalorder %s23, 1
      %p244 = por %p242, %p243
      %p245 = scmp.ne.s32.totalorder %s237, %s240
      %p246 = scmp.eq.s32.totalorder %s23, 0
      %p247 = por %p245, %p246
      %p248 = scmp.ne.s32.totalorder %s237, %s240
      %p249 = scmp.eq.s32.totalorder %s28, 1
      %p250 = por %p248, %p249
      %p251 = scmp.ne.s32.totalorder %s240, %s241
      %p252 = scmp.eq.s32.totalorder %s28, 0
      %p253 = por %p251, %p252
      %p254 = scmp.ne.s32.totalorder %s240, %s241
      %p255 = scmp.eq.s32.totalorder %s29, 1
      %p256 = por %p254, %p255
      %p258 = scmp.ne.s32.totalorder %s241, %s257
      %p259 = scmp.eq.s32.totalorder %s29, 0
      %p260 = por %p258, %p259
      %p261 = scmp.le.s32.totalorder 1, %s23
      %p262 = scmp.lt.s32.totalorder %s23, 3
      %p263 = pnand %p261, %p262
      %p264 = pneg %p263
      // Predicated region
      $region9: #{tpu_custom_call.1} parent=5 // pred_check
        _
      $region10: #{tpu_custom_call.1} parent=5 // pred_check_branch
        %266 = sbr.rel (%p263) target = $region12
      $region11: #{tpu_custom_call.1} parent=5 // pred_region
        %s267 = ssub.s32 %s23, 1
        // Predicated region
        $region13: #{tpu_custom_call.1} parent=11 // pred_check
          %p268 = pneg %p70
        $region14: #{tpu_custom_call.1} parent=11 // pred_check_branch
          %270 = sbr.rel (%p268) target = $region16
        $region15: #{tpu_custom_call.1} parent=11 // pred_region
          %s272 = ssub.s32 256, 256
          %273 = vsyncadd [#allocation6], %s272
          %s274 = sshll.u32 [#allocation5], 4
          %s275 = int_to_ptr.vmem [resolvable:$true] %s274
          %280 = dma.hbm_to_vmem [thread:$0]  %s1, 256, %s275, [#allocation6], 64, 64, 4
        $region16: #{tpu_custom_call.1} parent=11 // pred_fallthru
          _
        // Predicated region
        $region17: #{tpu_custom_call.1} parent=11 // pred_check
          %p281 = pneg %p91
        $region18: #{tpu_custom_call.1} parent=11 // pred_check_branch
          %283 = sbr.rel (%p281) target = $region20
        $region19: #{tpu_custom_call.1} parent=11 // pred_region
          _
        $region20: #{tpu_custom_call.1} parent=11 // pred_fallthru
          _
        // Predicated region
        $region21: #{tpu_custom_call.1} parent=11 // pred_check
          %p284 = pneg %p112
        $region22: #{tpu_custom_call.1} parent=11 // pred_check_branch
          %286 = sbr.rel (%p284) target = $region24
        $region23: #{tpu_custom_call.1} parent=11 // pred_region
          %s288 = ssub.s32 256, 256
          %289 = vsyncadd [#allocation6], %s288
          %s290 = sshll.u32 [#allocation7], 4
          %s291 = int_to_ptr.vmem [resolvable:$true] %s290
          %296 = dma.hbm_to_vmem [thread:$0]  %s3, 256, %s291, [#allocation6], 64, 64, 4
        $region24: #{tpu_custom_call.1} parent=11 // pred_fallthru
          _
        // Predicated region
        $region25: #{tpu_custom_call.1} parent=11 // pred_check
          %p297 = pneg %p133
        $region26: #{tpu_custom_call.1} parent=11 // pred_check_branch
          %299 = sbr.rel (%p297) target = $region28
        $region27: #{tpu_custom_call.1} parent=11 // pred_region
          _
        $region28: #{tpu_custom_call.1} parent=11 // pred_fallthru
          _
        // Predicated region
        $region29: #{tpu_custom_call.1} parent=11 // pred_check
          %p300 = pneg %p154
        $region30: #{tpu_custom_call.1} parent=11 // pred_check_branch
          %302 = sbr.rel (%p300) target = $region32
        $region31: #{tpu_custom_call.1} parent=11 // pred_region
          _
        $region32: #{tpu_custom_call.1} parent=11 // pred_fallthru
          _
        // Predicated region
        $region33: #{tpu_custom_call.1} parent=11 // pred_check
          %p303 = pneg %p175
        $region34: #{tpu_custom_call.1} parent=11 // pred_check_branch
          %305 = sbr.rel (%p303) target = $region36
        $region35: #{tpu_custom_call.1} parent=11 // pred_region
          _
        $region36: #{tpu_custom_call.1} parent=11 // pred_fallthru
          _
      $region12: #{tpu_custom_call.1} parent=5 // pred_fallthru
        _
      %p306 = scmp.lt.s32.totalorder %s23, 2
      // Predicated region
      $region37: #{tpu_custom_call.1} parent=5 // pred_check
        %p307 = pneg %p306
      $region38: #{tpu_custom_call.1} parent=5 // pred_check_branch
        %309 = sbr.rel (%p307) target = $region40
      $region39: #{tpu_custom_call.1} parent=5 // pred_region
        // Predicated region
        $region41: #{tpu_custom_call.1} parent=39 // pred_check
          %p310 = pneg %p43
        $region42: #{tpu_custom_call.1} parent=39 // pred_check_branch
          %312 = sbr.rel (%p310) target = $region44
        $region43: #{tpu_custom_call.1} parent=39 // pred_region
          %s313 = sand.u32 %s33, 1
          %s314 = scalar_lea.sflag [#allocation3], %s313
          %s315 = sand.u32 %s33, 1
          %s316 = smul.addr %s315, 8
          %s317 = scalar_lea.vmem [#allocation2], %s316
          %s319 = ssub.s32 128, 128
          %320 = vsyncadd %s314, %s319
          %s321 = smul.addr %s23, 128
          %s322 = scalar_lea.hbm %s0, %s321
          %s324 = sshll.u32 %s317, 4
          %s325 = int_to_ptr.vmem [resolvable:$true] %s324
          %327 = dma.hbm_to_vmem [thread:$0]  %s322, 128, %s325, %s314
        $region44: #{tpu_custom_call.1} parent=39 // pred_fallthru
          _
      $region40: #{tpu_custom_call.1} parent=5 // pred_fallthru
        _
      %p328 = scmp.le.s32.totalorder 1, %s23
      %p329 = scmp.lt.s32.totalorder %s23, 3
      %p330 = pnand %p328, %p329
      %p331 = pneg %p330
      // Predicated region
      $region45: #{tpu_custom_call.1} parent=5 // pred_check
        _
      $region46: #{tpu_custom_call.1} parent=5 // pred_check_branch
        %333 = sbr.rel (%p330) target = $region48
      $region47: #{tpu_custom_call.1} parent=5 // pred_region
        %s334 = ssub.s32 %s23, 1
        %s335 = sand.u32 %s36, 1
        %s336 = scalar_lea.sflag [#allocation3], %s335
        %s337 = sand.u32 %s36, 1
        %s338 = smul.addr %s337, 8
        %s339 = scalar_lea.vmem [#allocation2], %s338
        // Predicated region
        $region49: #{tpu_custom_call.1} parent=47 // pred_check
          %p340 = pneg %p49
        $region50: #{tpu_custom_call.1} parent=47 // pred_check_branch
          %342 = sbr.rel (%p340) target = $region52
        $region51: #{tpu_custom_call.1} parent=47 // pred_region
          %343 = dma.done %s336, 128
        $region52: #{tpu_custom_call.1} parent=47 // pred_fallthru
          _
        // Predicated region
        $region53: #{tpu_custom_call.1} parent=47 // pred_check
          %p344 = pneg %p70
        $region54: #{tpu_custom_call.1} parent=47 // pred_check_branch
          %346 = sbr.rel (%p344) target = $region56
        $region55: #{tpu_custom_call.1} parent=47 // pred_region
          %347 = dma.done [#allocation6], 256
        $region56: #{tpu_custom_call.1} parent=47 // pred_fallthru
          _
        // Predicated region
        $region57: #{tpu_custom_call.1} parent=47 // pred_check
          %p348 = pneg %p112
        $region58: #{tpu_custom_call.1} parent=47 // pred_check_branch
          %350 = sbr.rel (%p348) target = $region60
        $region59: #{tpu_custom_call.1} parent=47 // pred_region
          %351 = dma.done [#allocation6], 256
        $region60: #{tpu_custom_call.1} parent=47 // pred_fallthru
          _
        %s352 = sand.u32 %s36, 1
        %s353 = scalar_lea.sflag [#allocation3], %s352
        %s354 = sand.u32 %s36, 1
        %s355 = smul.addr %s354, 8
        %s356 = scalar_lea.vmem [#allocation2], %s355
        %p357 = pneg %p49
        %p358 = pneg %p46
        %p359 = pneg %p70
        %p360 = pneg %p67
        %p361 = pneg %p91
        %p362 = pneg %p88
        %p363 = pneg %p112
        %p364 = pneg %p109
        %p365 = pneg %p133
        %p366 = pneg %p130
        %p367 = pneg %p154
        %p368 = pneg %p151
        %p369 = pneg %p175
        %p370 = pneg %p172
        %p371 = pneg %p201
        %p372 = pneg %p198
        %s373 = sand.u32 %s188, 1
        %s374 = scalar_lea.sflag [#allocation4], %s373
        %s375 = sand.u32 %s188, 1
        %s376 = smul.addr %s375, 8
        %s377 = scalar_lea.vmem [#allocation8], %s376
        %p378 = pneg %p227
        %p379 = pneg %p224
        %p380 = scmp.lt.s32.totalorder %s28, 1
        %s381 = scalar_select %p380, %s28, 1
        %s382 = smul.addr %s381, 8
        %s383 = scalar_lea.vmem %s8, %s382
        %p384 = pneg %p253
        %p385 = pneg %p250
        %p386 = scmp.lt.s32.totalorder %s28, 1
        %s387 = scalar_select %p386, %s28, 1
        %s388 = smul.addr %s387, 8
        %s389 = scalar_lea.vmem %s9, %s388
        %p390 = scmp.lt.s32.totalorder %s28, 1
        %s391 = scalar_select %p390, %s28, 1
        %s392 = smul.addr %s391, 8
        %s393 = scalar_lea.vmem %s8, %s392
        %p394 = scmp.lt.s32.totalorder %s28, 1
        %s395 = scalar_select %p394, %s28, 1
        %s396 = smul.addr %s395, 8
        %s397 = scalar_lea.vmem %s9, %s396
        %v399 = vld [vmem:[%s339] sm:$0xff]
        %v400 = vpack.c.bf16 %v399, %v399
        %v401 = vld [vmem:[#allocation5] sm:$0xf]
        %v402 = vld [vmem:[#allocation5 + $0x4] sm:$0xf]
        %v403 = vld [vmem:[#allocation5 + $0x8] sm:$0xf]
        %v404 = vld [vmem:[#allocation5 + $0xc] sm:$0xf]
        %v405 = vld [vmem:[%s2] sm:$0x1]
        %v407 = vlaneseq
        %v408 = vshrl.u32 %v407, 7
        %v409 = vsub.s32 0, %v408
        %v410 = vrot.slane %v405, %v409
        %v416 = vunpack.c.l.b16 %v401
        %v417 = vunpack.c.l.b16 %v402
        %v418 = vunpack.c.l.b16 %v403
        %v419 = vunpack.c.l.b16 %v404
        %v420 = vpack.c.b16 %v417, %v416
        %v421 = vpack.c.b16 %v419, %v418
        %vm424 = vcmask 261120
        %v426 = vsel %vm424, %v400, 0
        %428 = vmatprep.subr.bf16.mxu0 0
        %429 = vmatpush1.bf16.msra.mxu0 %v420
        %430 = vmatprep.subr.bf16.mxu0 0
        %431 = vmatpush1.bf16.msra.mxu0 %v421
        %432 = vmatprep.subr.bf16.mxu0 0
        %433 = vmatpush1.bf16.msra.mxu0 0
        %434 = vmatprep.subr.bf16.mxu0 0
        %435 = vmatpush1.bf16.msra.mxu0 0
        %436 = vmatprep.subr.bf16.mxu0 0
        %437 = vmatpush1.bf16.msra.mxu0 0
        %438 = vmatprep.subr.bf16.mxu0 0
        %439 = vmatpush1.bf16.msra.mxu0 0
        %440 = vmatprep.subr.bf16.mxu0 0
        %441 = vmatpush1.bf16.msra.mxu0 0
        %442 = vmatprep.subr.bf16.mxu0 0
        %443 = vmatpush1.bf16.msra.mxu0 0
        %444 = vmatprep.subr.bf16.mxu0 0
        %445 = vmatpush1.bf16.msra.mxu0 0
        %446 = vmatprep.subr.bf16.mxu0 0
        %447 = vmatpush1.bf16.msra.mxu0 0
        %448 = vmatprep.subr.bf16.mxu0 0
        %449 = vmatpush1.bf16.msra.mxu0 0
        %450 = vmatprep.subr.bf16.mxu0 0
        %451 = vmatpush1.bf16.msra.mxu0 0
        %452 = vmatprep.subr.bf16.mxu0 0
        %453 = vmatpush1.bf16.msra.mxu0 0
        %454 = vmatprep.subr.bf16.mxu0 0
        %455 = vmatpush1.bf16.msra.mxu0 0
        %456 = vmatprep.subr.bf16.mxu0 0
        %457 = vmatpush1.bf16.msra.mxu0 0
        %458 = vmatprep.subr.bf16.mxu0 0
        %459 = vmatpush1.bf16.msra.mxu0 0
        %460 = vmatprep.mubr.bf16.mxu0 0
        %461 = vmatmul.mubr.bf16.gmra.mrb[0].mxu0 %v426
        %v462 = vpop.f32.mrb[0].mxu0
        %v463 = vadd.f32 %v410, %v462
        %v464 = vpop.f32.mrb[0].mxu0
        %v465 = vpop.f32.mrb[0].mxu0
        %v466 = vpop.f32.mrb[0].mxu0
        %467 = vdwg.mxu0
        %v468 = vpack.c.bf16 %v463, %v463
        %470 = vrot.lane.b32.xlu0 %v468, 96
        %v471 = vpop.permute.xlu0 %470
        %v473 = vsel %vm424, %v468, 0
        %v476 = vsel %vm424, %v471, 0
        %478 = vmatprep.subr.bf16.mxu0 0
        %479 = vmatpush1.bf16.xpose.msra.mxu0 %v476
        %480 = vmatprep.subr.bf16.mxu0 0
        %481 = vmatpush1.bf16.xpose.msra.mxu0 0
        %482 = vmatprep.subr.bf16.mxu0 0
        %483 = vmatpush1.bf16.xpose.msra.mxu0 0
        %484 = vmatprep.subr.bf16.mxu0 0
        %485 = vmatpush1.bf16.xpose.msra.mxu0 0
        %486 = vmatprep.subr.bf16.mxu0 0
        %487 = vmatpush1.bf16.xpose.msra.mxu0 0
        %488 = vmatprep.subr.bf16.mxu0 0
        %489 = vmatpush1.bf16.xpose.msra.mxu0 0
        %490 = vmatprep.subr.bf16.mxu0 0
        %491 = vmatpush1.bf16.xpose.msra.mxu0 0
        %492 = vmatprep.subr.bf16.mxu0 0
        %493 = vmatpush1.bf16.xpose.msra.mxu0 0
        %494 = vmatprep.subr.bf16.mxu0 0
        %495 = vmatpush1.bf16.xpose.msra.mxu0 0
        %496 = vmatprep.subr.bf16.mxu0 0
        %497 = vmatpush1.bf16.xpose.msra.mxu0 0
        %498 = vmatprep.subr.bf16.mxu0 0
        %499 = vmatpush1.bf16.xpose.msra.mxu0 0
        %500 = vmatprep.subr.bf16.mxu0 0
        %501 = vmatpush1.bf16.xpose.msra.mxu0 0
        %502 = vmatprep.subr.bf16.mxu0 0
        %503 = vmatpush1.bf16.xpose.msra.mxu0 0
        %504 = vmatprep.subr.bf16.mxu0 0
        %505 = vmatpush1.bf16.xpose.msra.mxu0 0
        %506 = vmatprep.subr.bf16.mxu0 0
        %507 = vmatpush1.bf16.xpose.msra.mxu0 0
        %508 = vmatprep.subr.bf16.mxu0 0
        %509 = vmatpush1.bf16.xpose.msra.mxu0 0
        %510 = vmatprep.mubr.bf16.mxu0 0
        %511 = vmatmul.mubr.bf16.gmra.mrb[0].mxu0 %v473
        %v512 = vpop.f32.mrb[0].mxu0
        %v513 = vadd.f32 0.0, %v512
        %v514 = vpop.f32.mrb[0].mxu0
        %v515 = vpop.f32.mrb[0].mxu0
        %v516 = vpop.f32.mrb[0].mxu0
        %517 = vdwg.mxu0
        %vm518 = vcmask 64512
        %v519 = vsel %vm518, %v513, -inf
        %520 = vmax.xlane.f32.xlu0 %v519
        %v521 = vpop.xlane.xlu0 %520
        %v522 = vsub.f32 %v513, %v521
        %v523 = vmul.f32 %v522, 1.442695
        %v524 = vpow.pop %v523
        %v525 = vsel %vm518, %v524, 0.0
        %526 = vadd.xlane.f32.xlu0 %v525
        %v527 = vpop.xlane.xlu0 %526
        %v528 = vrcp.pop %v527
        %v529 = vmul.f32 %v524, %v528
        %v530 = vpack.c.bf16 %v529, %v529
        %531 = vrot.lane.b32.xlu0 %v468, 64
        %v532 = vpop.permute.xlu0 %531
        %v534 = vsel %vm518, %v530, 0
        %vm536 = vcmask 1043456
        %v538 = vsel %vm536, %v532, 0
        %540 = vmatprep.subr.bf16.mxu0 0
        %541 = vmatpush1.bf16.msra.mxu0 %v538
        %542 = vmatprep.subr.bf16.mxu0 0
        %543 = vmatpush1.bf16.msra.mxu0 0
        %544 = vmatprep.subr.bf16.mxu0 0
        %545 = vmatpush1.bf16.msra.mxu0 0
        %546 = vmatprep.subr.bf16.mxu0 0
        %547 = vmatpush1.bf16.msra.mxu0 0
        %548 = vmatprep.subr.bf16.mxu0 0
        %549 = vmatpush1.bf16.msra.mxu0 0
        %550 = vmatprep.subr.bf16.mxu0 0
        %551 = vmatpush1.bf16.msra.mxu0 0
        %552 = vmatprep.subr.bf16.mxu0 0
        %553 = vmatpush1.bf16.msra.mxu0 0
        %554 = vmatprep.subr.bf16.mxu0 0
        %555 = vmatpush1.bf16.msra.mxu0 0
        %556 = vmatprep.subr.bf16.mxu0 0
        %557 = vmatpush1.bf16.msra.mxu0 0
        %558 = vmatprep.subr.bf16.mxu0 0
        %559 = vmatpush1.bf16.msra.mxu0 0
        %560 = vmatprep.subr.bf16.mxu0 0
        %561 = vmatpush1.bf16.msra.mxu0 0
        %562 = vmatprep.subr.bf16.mxu0 0
        %563 = vmatpush1.bf16.msra.mxu0 0
        %564 = vmatprep.subr.bf16.mxu0 0
        %565 = vmatpush1.bf16.msra.mxu0 0
        %566 = vmatprep.subr.bf16.mxu0 0
        %567 = vmatpush1.bf16.msra.mxu0 0
        %568 = vmatprep.subr.bf16.mxu0 0
        %569 = vmatpush1.bf16.msra.mxu0 0
        %570 = vmatprep.subr.bf16.mxu0 0
        %571 = vmatpush1.bf16.msra.mxu0 0
        %572 = vmatprep.mubr.bf16.mxu0 0
        %573 = vmatmul.mubr.bf16.gmra.mrb[0].mxu0 %v534
        %v574 = vpop.f32.mrb[0].mxu0
        %v575 = vadd.f32 0.0, %v574
        %v576 = vpop.f32.mrb[0].mxu0
        %v577 = vpop.f32.mrb[0].mxu0
        %v578 = vpop.f32.mrb[0].mxu0
        %579 = vdwg.mxu0
        %v580 = vpack.c.bf16 %v575, %v575
        %v581 = vld [vmem:[#allocation7] sm:$0xf]
        %v582 = vld [vmem:[#allocation7 + $0x4] sm:$0xf]
        %v583 = vld [vmem:[#allocation7 + $0x8] sm:$0xf]
        %v584 = vld [vmem:[#allocation7 + $0xc] sm:$0xf]
        %v585 = vld [vmem:[%s4] sm:$0x1]
        %v587 = vlaneseq
        %v588 = vshrl.u32 %v587, 7
        %v589 = vsub.s32 0, %v588
        %v590 = vrot.slane %v585, %v589
        %v596 = vunpack.c.l.b16 %v581
        %v597 = vunpack.c.l.b16 %v582
        %v598 = vunpack.c.l.b16 %v583
        %v599 = vunpack.c.l.b16 %v584
        %v600 = vpack.c.b16 %v597, %v596
        %v601 = vpack.c.b16 %v599, %v598
        %v605 = vsel %vm424, %v580, 0
        %607 = vmatprep.subr.bf16.mxu0 0
        %608 = vmatpush1.bf16.msra.mxu0 %v600
        %609 = vmatprep.subr.bf16.mxu0 0
        %610 = vmatpush1.bf16.msra.mxu0 %v601
        %611 = vmatprep.subr.bf16.mxu0 0
        %612 = vmatpush1.bf16.msra.mxu0 0
        %613 = vmatprep.subr.bf16.mxu0 0
        %614 = vmatpush1.bf16.msra.mxu0 0
        %615 = vmatprep.subr.bf16.mxu0 0
        %616 = vmatpush1.bf16.msra.mxu0 0
        %617 = vmatprep.subr.bf16.mxu0 0
        %618 = vmatpush1.bf16.msra.mxu0 0
        %619 = vmatprep.subr.bf16.mxu0 0
        %620 = vmatpush1.bf16.msra.mxu0 0
        %621 = vmatprep.subr.bf16.mxu0 0
        %622 = vmatpush1.bf16.msra.mxu0 0
        %623 = vmatprep.subr.bf16.mxu0 0
        %624 = vmatpush1.bf16.msra.mxu0 0
        %625 = vmatprep.subr.bf16.mxu0 0
        %626 = vmatpush1.bf16.msra.mxu0 0
        %627 = vmatprep.subr.bf16.mxu0 0
        %628 = vmatpush1.bf16.msra.mxu0 0
        %629 = vmatprep.subr.bf16.mxu0 0
        %630 = vmatpush1.bf16.msra.mxu0 0
        %631 = vmatprep.subr.bf16.mxu0 0
        %632 = vmatpush1.bf16.msra.mxu0 0
        %633 = vmatprep.subr.bf16.mxu0 0
        %634 = vmatpush1.bf16.msra.mxu0 0
        %635 = vmatprep.subr.bf16.mxu0 0
        %636 = vmatpush1.bf16.msra.mxu0 0
        %637 = vmatprep.subr.bf16.mxu0 0
        %638 = vmatpush1.bf16.msra.mxu0 0
        %639 = vmatprep.mubr.bf16.mxu0 0
        %640 = vmatmul.mubr.bf16.gmra.mrb[0].mxu0 %v605
        %v641 = vpop.f32.mrb[0].mxu0
        %v642 = vadd.f32 %v590, %v641
        %v643 = vpop.f32.mrb[0].mxu0
        %v644 = vpop.f32.mrb[0].mxu0
        %v645 = vpop.f32.mrb[0].mxu0
        %646 = vdwg.mxu0
        %v647 = vadd.f32 %v399, %v642
        %v648 = vsel %vm424, %v647, 0.0
        %649 = vadd.xlane.f32.xlu0 %v648
        %v650 = vpop.xlane.xlu0 %649
        %v651 = vrcp.pop 32.0
        %v652 = vmul.f32 %v650, %v651
        %v653 = vsub.f32 %v647, %v652
        %v654 = vmul.f32 %v653, %v653
        %v655 = vsel %vm424, %v654, 0.0
        %656 = vadd.xlane.f32.xlu0 %v655
        %v657 = vpop.xlane.xlu0 %656
        %v658 = vmul.f32 %v657, %v651
        %v659 = vadd.f32 %v658, 1e-05
        %v660 = vrsqrt.pop %v659
        %v661 = vmul.f32 %v653, %v660
        %v662 = vld [vmem:[%s5] sm:$0x1]
        %v664 = vlaneseq
        %v665 = vshrl.u32 %v664, 7
        %v666 = vsub.s32 0, %v665
        %v667 = vrot.slane %v662, %v666
        %v669 = vmul.f32 %v661, %v667
        %v670 = vld [vmem:[%s6] sm:$0x1]
        %v672 = vlaneseq
        %v673 = vshrl.u32 %v672, 7
        %v674 = vsub.s32 0, %v673
        %v675 = vrot.slane %v670, %v674
        %v677 = vadd.f32 %v669, %v675
        %678 = vst.msk [vmem:[%s377] sm:$0xff] %vm424, %v677
        %v679 = vlaneseq
        %v680 = vand.u32 %v679, 127
        %v681 = vsel %vm518, %v529, -inf
        %682 = vmax.xlane.f32.xlu0 %v681
        %v683 = vpop.xlane.xlu0 %682
        %vm684 = vcmp.eq.f32.partialorder %v529, %v683
        %v685 = vsel %vm684, %v680, 8
        %v686 = vsel %vm518, %v685, 2147483647
        %v687 = vand.u32 %v686, 65535
        %v688 = vshra.s32 %v686, 16
        %v689 = vcvt.s32.f32 %v687
        %v690 = vcvt.s32.f32 %v688
        %691 = vmin.xlane.f32.xlu0 %v690
        %v692 = vpop.xlane.xlu0 %691
        %vm693 = vcmp.eq.f32.partialorder %v690, %v692
        %v694 = vsel %vm693, %v689, inf
        %695 = vmin.xlane.f32.xlu0 %v694
        %v696 = vpop.xlane.xlu0 %695
        %v697 = vcvt.f32.s32 %v696
        %v698 = vcvt.f32.s32 %v692
        %v699 = vshll.u32 %v698, 16
        %v700 = vadd.s32 %v699, %v697
        %vm701 = vcmp.eq.s32.totalorder %v680, %v700
        %v702 = vsel %vm701, -inf, %v529
        %v703 = vsel %vm518, %v702, -inf
        %704 = vmax.xlane.f32.xlu0 %v703
        %v705 = vpop.xlane.xlu0 %704
        %vm706 = vcmp.eq.f32.partialorder %v702, %v705
        %v707 = vsel %vm706, %v680, 8
        %v708 = vsel %vm518, %v707, 2147483647
        %v709 = vand.u32 %v708, 65535
        %v710 = vshra.s32 %v708, 16
        %v711 = vcvt.s32.f32 %v709
        %v712 = vcvt.s32.f32 %v710
        %713 = vmin.xlane.f32.xlu0 %v712
        %v714 = vpop.xlane.xlu0 %713
        %vm715 = vcmp.eq.f32.partialorder %v712, %v714
        %v716 = vsel %vm715, %v711, inf
        %717 = vmin.xlane.f32.xlu0 %v716
        %v718 = vpop.xlane.xlu0 %717
        %v719 = vcvt.f32.s32 %v718
        %v720 = vcvt.f32.s32 %v714
        %v721 = vshll.u32 %v720, 16
        %v722 = vadd.s32 %v721, %v719
        %vm723 = vcmp.eq.s32.totalorder %v680, %v722
        %v724 = vsel %vm723, -inf, %v702
        %v725 = vsel %vm518, %v724, -inf
        %726 = vmax.xlane.f32.xlu0 %v725
        %v727 = vpop.xlane.xlu0 %726
        %vm728 = vcmp.eq.f32.partialorder %v724, %v727
        %v729 = vsel %vm728, %v680, 8
        %v730 = vsel %vm518, %v729, 2147483647
        %v731 = vand.u32 %v730, 65535
        %v732 = vshra.s32 %v730, 16
        %v733 = vcvt.s32.f32 %v731
        %v734 = vcvt.s32.f32 %v732
        %735 = vmin.xlane.f32.xlu0 %v734
        %v736 = vpop.xlane.xlu0 %735
        %vm737 = vcmp.eq.f32.partialorder %v734, %v736
        %v738 = vsel %vm737, %v733, inf
        %739 = vmin.xlane.f32.xlu0 %v738
        %v740 = vpop.xlane.xlu0 %739
        %v741 = vcvt.f32.s32 %v740
        %v742 = vcvt.f32.s32 %v736
        %v743 = vshll.u32 %v742, 16
        %v744 = vadd.s32 %v743, %v741
        %vm745 = vcmp.eq.s32.totalorder %v680, %v744
        %v746 = vsel %vm745, -inf, %v724
        %v747 = vsel %vm518, %v746, -inf
        %748 = vmax.xlane.f32.xlu0 %v747
        %v749 = vpop.xlane.xlu0 %748
        %vm750 = vcmp.eq.f32.partialorder %v746, %v749
        %v751 = vsel %vm750, %v680, 8
        %v752 = vsel %vm518, %v751, 2147483647
        %v753 = vand.u32 %v752, 65535
        %v754 = vshra.s32 %v752, 16
        %v755 = vcvt.s32.f32 %v753
        %v756 = vcvt.s32.f32 %v754
        %757 = vmin.xlane.f32.xlu0 %v756
        %v758 = vpop.xlane.xlu0 %757
        %vm759 = vcmp.eq.f32.partialorder %v756, %v758
        %v760 = vsel %vm759, %v755, inf
        %761 = vmin.xlane.f32.xlu0 %v760
        %v762 = vpop.xlane.xlu0 %761
        %v763 = vcvt.f32.s32 %v762
        %v764 = vcvt.f32.s32 %v758
        %v765 = vshll.u32 %v764, 16
        %v766 = vadd.s32 %v765, %v763
        %vm767 = vcmask 7168
        %v768 = vsel %vm767, %v683, %v705
        %vm769 = vcmask 15360
        %v770 = vsel %vm769, %v768, %v727
        %vm771 = vcmask 23552
        %v772 = vsel %vm771, %v770, %v749
        %vm773 = vcmask 31744
        %774 = vst.msk [vmem:[%s393] sm:$0xff] %vm773, %v772
        %v775 = vsel %vm767, %v700, %v722
        %v776 = vsel %vm769, %v775, %v744
        %v777 = vsel %vm771, %v776, %v766
        %778 = vst.msk [vmem:[%s397] sm:$0xff] %vm773, %v777
        %s779 = sand.u32 %s188, 1
        %s780 = scalar_lea.sflag [#allocation4], %s779
        %s781 = sand.u32 %s188, 1
        %s782 = smul.addr %s781, 8
        %s783 = scalar_lea.vmem [#allocation8], %s782
        %p784 = scmp.lt.s32.totalorder %s28, 1
        %s785 = scalar_select %p784, %s28, 1
        %s786 = smul.addr %s785, 8
        %s787 = scalar_lea.vmem %s8, %s786
        %p788 = scmp.lt.s32.totalorder %s28, 1
        %s789 = scalar_select %p788, %s28, 1
        %s790 = smul.addr %s789, 8
        %s791 = scalar_lea.vmem %s9, %s790
        // Predicated region
        $region61: #{tpu_custom_call.1} parent=47 // pred_check
          %p792 = pneg %p198
        $region62: #{tpu_custom_call.1} parent=47 // pred_check_branch
          %794 = sbr.rel (%p792) target = $region64
        $region63: #{tpu_custom_call.1} parent=47 // pred_region
          %s796 = ssub.s32 128, 128
          %797 = vsyncadd %s780, %s796
          %s798 = smul.addr %s28, 128
          %s799 = scalar_lea.hbm %s7, %s798
          %s801 = sshll.u32 %s783, 4
          %s802 = int_to_ptr.vmem [resolvable:$true] %s801
          %804 = dma.vmem_to_hbm [thread:$0]  %s802, 128, %s799, %s780
        $region64: #{tpu_custom_call.1} parent=47 // pred_fallthru
          _
        // Predicated region
        $region65: #{tpu_custom_call.1} parent=47 // pred_check
          %p805 = pneg %p224
        $region66: #{tpu_custom_call.1} parent=47 // pred_check_branch
          %807 = sbr.rel (%p805) target = $region68
        $region67: #{tpu_custom_call.1} parent=47 // pred_region
          _
        $region68: #{tpu_custom_call.1} parent=47 // pred_fallthru
          _
        // Predicated region
        $region69: #{tpu_custom_call.1} parent=47 // pred_check
          %p808 = pneg %p250
        $region70: #{tpu_custom_call.1} parent=47 // pred_check_branch
          %810 = sbr.rel (%p808) target = $region72
        $region71: #{tpu_custom_call.1} parent=47 // pred_region
          _
        $region72: #{tpu_custom_call.1} parent=47 // pred_fallthru
          _
      $region48: #{tpu_custom_call.1} parent=5 // pred_fallthru
        _
      %p811 = scmp.le.s32.totalorder 2, %s23
      // Predicated region
      $region73: #{tpu_custom_call.1} parent=5 // pred_check
        %p812 = pneg %p811
      $region74: #{tpu_custom_call.1} parent=5 // pred_check_branch
        %814 = sbr.rel (%p812) target = $region76
      $region75: #{tpu_custom_call.1} parent=5 // pred_region
        %s815 = ssub.s32 %s23, 2
        // Predicated region
        $region77: #{tpu_custom_call.1} parent=75 // pred_check
          %p816 = pneg %p204
        $region78: #{tpu_custom_call.1} parent=75 // pred_check_branch
          %818 = sbr.rel (%p816) target = $region80
        $region79: #{tpu_custom_call.1} parent=75 // pred_region
          %s819 = sand.u32 %s189, 1
          %s820 = scalar_lea.sflag [#allocation4], %s819
          %s821 = sand.u32 %s189, 1
          %s822 = smul.addr %s821, 8
          %s823 = scalar_lea.vmem [#allocation8], %s822
          %824 = dma.done %s820, 128
        $region80: #{tpu_custom_call.1} parent=75 // pred_fallthru
          _
        // Predicated region
        $region81: #{tpu_custom_call.1} parent=75 // pred_check
          %p825 = pneg %p230
        $region82: #{tpu_custom_call.1} parent=75 // pred_check_branch
          %827 = sbr.rel (%p825) target = $region84
        $region83: #{tpu_custom_call.1} parent=75 // pred_region
          %p828 = scmp.lt.s32.totalorder %s29, 1
          %s829 = scalar_select %p828, %s29, 1
          %s830 = smul.addr %s829, 8
          %s831 = scalar_lea.vmem %s8, %s830
        $region84: #{tpu_custom_call.1} parent=75 // pred_fallthru
          _
        // Predicated region
        $region85: #{tpu_custom_call.1} parent=75 // pred_check
          %p832 = pneg %p256
        $region86: #{tpu_custom_call.1} parent=75 // pred_check_branch
          %834 = sbr.rel (%p832) target = $region88
        $region87: #{tpu_custom_call.1} parent=75 // pred_region
          %p835 = scmp.lt.s32.totalorder %s29, 1
          %s836 = scalar_select %p835, %s29, 1
          %s837 = smul.addr %s836, 8
          %s838 = scalar_lea.vmem %s9, %s837
        $region88: #{tpu_custom_call.1} parent=75 // pred_fallthru
          _
      $region76: #{tpu_custom_call.1} parent=5 // pred_fallthru
        _
    $region6: #{tpu_custom_call.1} parent=1 // loop_footer
      %s27 = sadd.s32 1, %s23
    $region7: #{tpu_custom_call.1} parent=1 // loop_footer_branch
      %22 = sbr.rel target = $region3
    $region8: #{tpu_custom_call.1} parent=1 // loop_exit
      _
    %839 = vsyncpa [#allocation3], 1
    %s840 = scalar_lea.sflag [#allocation3], 1
    %841 = vsyncpa %s840, 1
    %842 = vsyncpa [#allocation6], 1
    %843 = vsyncpa [#allocation4], 1
    %s844 = scalar_lea.sflag [#allocation4], 1
    %845 = vsyncpa %s844, 1

</llo_original>
